<compile_context>
chip_gen: v7x
topology: tpu7x:2x2x1
jax: 0.10.0
libtpu: 0.0.40
codegen_flags: <defaults>
</compile_context>

<pallas_src>
import functools
import math

import jax
import jax.numpy as jnp
from jax.experimental import pallas as pl
from jax.experimental.pallas import tpu as pltpu


def _attention_kernel(x_ref, y_ref, w_ref, b_ref, w1_ref, b1_ref, w2_ref,
                      pooled_ref, ylin_ref, *, approx_recip):
    bb, n, d = x_ref.shape

    x = x_ref[...]                                   # (bb, N, D)  mxu_dtype
    y = y_ref[...]                                   # (bb, D)     mxu_dtype

    # _y = linear1(y): (bb, D) @ (D, D), f32 accumulation on the MXU.
    ylin = jnp.dot(y, w1_ref[...],
                   preferred_element_type=jnp.float32) + b1_ref[...]   # (bb, D) f32

    # linear(x): one fused (bb*N, D) @ (D, D) matmul (big M, single MXU pass).
    h = jnp.dot(x.reshape(bb * n, d), w_ref[...],
                preferred_element_type=jnp.float32) + b_ref[...]
    h = h.reshape(bb, n, d)                          # (bb, N, D)  f32

    # z = tanh(linear(x) + _y)   (EUP tanh, f32)
    z = jnp.tanh(h + ylin[:, None, :])               # (bb, N, D)  f32

    # scores = linear2(z) (no bias): lane-dense VPU/XLU reduce against (1, D) row.
    s = jnp.sum(z * w2_ref[...], axis=-1)            # (bb, N)  f32

    # numerically-stable softmax over N.
    s = s - jnp.max(s, axis=-1, keepdims=True)
    e = jnp.exp(s)
    denom = jnp.sum(e, axis=-1, keepdims=True)
    if approx_recip:
        att = e * pl.reciprocal(denom, approx=True)  # EUP slot, frees VALU
    else:
        att = e / denom                              # exact (f32 validation path)

    # pooled = att @ x  (batched matvec, M=1 -> VPU weighted sum over N; f32 acc)
    pooled = jnp.sum(att[:, :, None] * x, axis=1)    # (bb, D)  f32

    pooled_ref[...] = pooled.astype(pooled_ref.dtype)
    ylin_ref[...] = ylin.astype(ylin_ref.dtype)


def _pick_block_b(B, N, D, x_itemsize, w_itemsize,
                  vmem_budget_bytes=24 << 20, min_steps=4):
    """VMEM-budget-driven batch-block size.

    Per batch row in a block we hold: the double-buffered x tile
    (2 * N*D*x_itemsize) plus roughly two f32 (N, D) intermediates (h / z).
    Resident double-buffered (D, D) weights are charged up front.  We also
    prefer >= min_steps grid steps so the pipeline overlaps DMA with compute,
    and block_b must divide B and be a multiple of 8 (or == B) so the 2-D
    (block_b, D) y / output blocks are sublane-dense.
    """
    weight_resident = 2 * 2 * D * D * w_itemsize           # w, w1 double-buffered
    budget = max(1 << 20, vmem_budget_bytes - weight_resident)
    per_row = N * D * (2 * x_itemsize + 2 * 4)
    cap = max(1, budget // max(per_row, 1))
    target = min(cap, max(1, B // min_steps))

    valid = [bb for bb in range(1, B + 1)
             if B % bb == 0 and (bb % 8 == 0 or bb == B)]
    under = [bb for bb in valid if bb <= target]
    if under:
        return max(under)
    return min(valid)        # tiny B: fall back to the whole batch (always valid)


def attention_pallas(x, y, w, b, w1, b1, w2, *, block_b=None,
                     mxu_dtype=jnp.bfloat16):
    B, N, D = x.shape
    assert y.shape == (B, D)
    assert w.shape == (D, D) and w1.shape == (D, D)
    assert b.shape == (1, D) and b1.shape == (1, D) and w2.shape == (1, D)

    out_dtype = x.dtype
    approx_recip = (mxu_dtype != jnp.float32)

    # Cast MXU operands at the call boundary (halves x HBM traffic + weight
    # residency on the bf16 path; no in-kernel full-tile casts).
    x_in = x.astype(mxu_dtype)
    y_in = y.astype(mxu_dtype)
    w_in = w.astype(mxu_dtype)
    w1_in = w1.astype(mxu_dtype)
    x_itemsize = jnp.dtype(mxu_dtype).itemsize

    if block_b is None:
        block_b = _pick_block_b(B, N, D, x_itemsize, x_itemsize)
    assert B % block_b == 0 and (block_b % 8 == 0 or block_b == B)
    n_blocks = B // block_b

    # Scoped-VMEM limit: above v5e/v6e defaults (16/32 MiB), below v7x physical
    # (64 MiB).  Sized from the actual per-step footprint with headroom.
    est = (2 * 2 * D * D * x_itemsize                       # resident weights
           + block_b * N * D * (2 * x_itemsize + 3 * 4)     # x dbl-buf + f32 temps
           + 6 * block_b * D * 4)                           # y / pooled / ylin
    vmem_limit = min(48 << 20, max(32 << 20, int(1.5 * est)))

    kernel = functools.partial(_attention_kernel, approx_recip=approx_recip)
    full = lambda shape: pl.BlockSpec(shape, lambda i, _s=shape: (0,) * len(_s))

    pooled, ylin = pl.pallas_call(
        kernel,
        out_shape=(jax.ShapeDtypeStruct((B, D), out_dtype),
                   jax.ShapeDtypeStruct((B, D), out_dtype)),
        grid_spec=pltpu.PrefetchScalarGridSpec(
            num_scalar_prefetch=0,
            grid=(n_blocks,),
            in_specs=[
                pl.BlockSpec((block_b, N, D), lambda i: (i, 0, 0)),   # x
                pl.BlockSpec((block_b, D), lambda i: (i, 0)),         # y
                full((D, D)),                                         # W  (linear)
                full((1, D)),                                         # b
                full((D, D)),                                         # W1 (linear1)
                full((1, D)),                                         # b1
                full((1, D)),                                         # w2 (linear2 row)
            ],
            out_specs=[
                pl.BlockSpec((block_b, D), lambda i: (i, 0)),         # pooled x
                pl.BlockSpec((block_b, D), lambda i: (i, 0)),         # _y
            ],
        ),
        compiler_params=pltpu.CompilerParams(
            dimension_semantics=("parallel",),
            vmem_limit_bytes=vmem_limit),
    )(x_in, y_in, w_in, b, w1_in, b1, w2)

    return pooled, ylin


def _xavier_uniform(key, fan_in, fan_out, dtype=jnp.float32):
    # matches torch.nn.init.xavier_uniform_ bound
    a = math.sqrt(6.0 / (fan_in + fan_out))
    return jax.random.uniform(key, (fan_in, fan_out), dtype, minval=-a, maxval=a)


def _reference(x, y, w, b, w1, b1, w2):
    ylin = y @ w1 + b1                              # (B, D)
    z = jnp.tanh(x @ w + b + ylin[:, None, :])      # (B, N, D)
    s = jnp.einsum('bnd,d->bn', z, w2[0])           # (B, N)   linear2, no bias
    att = jax.nn.softmax(s, axis=-1)
    pooled = jnp.einsum('bn,bnd->bd', att, x)       # (B, D)
    return pooled, ylin


if __name__ == "__main__":
    B, N, d_model = 2, 8, 32

    key = jax.random.PRNGKey(0)
    kx, ky, kw, kw1, kw2 = jax.random.split(key, 5)

    x = jax.random.normal(kx, (B, N, d_model), jnp.float32)
    y = jax.random.normal(ky, (B, d_model), jnp.float32)

    w = _xavier_uniform(kw, d_model, d_model)        # linear
    w1 = _xavier_uniform(kw1, d_model, d_model)      # linear1
    w2 = _xavier_uniform(kw2, d_model, 1).T          # linear2 (no bias), (1, D) row
    b = jnp.zeros((1, d_model), jnp.float32)         # init(): bias = 0
    b1 = jnp.zeros((1, d_model), jnp.float32)

    ref_pooled, ref_ylin = _reference(x, y, w, b, w1, b1, w2)

    # f32-operand MXU path (exact reciprocal -> tight check)
    pooled32, ylin32 = attention_pallas(x, y, w, b, w1, b1, w2,
                                        mxu_dtype=jnp.float32)
    jax.block_until_ready((pooled32, ylin32))
    assert pooled32.shape == (B, d_model) and ylin32.shape == (B, d_model)
    assert jnp.allclose(pooled32, ref_pooled, atol=5e-3, rtol=5e-3), "pooled f32 mismatch"
    assert jnp.allclose(ylin32, ref_ylin, atol=5e-3, rtol=5e-3), "ylin f32 mismatch"

    # bf16-operand MXU path (bf16 HBM/x stream, f32 accumulation; looser tolerance)
    pooled16, ylin16 = attention_pallas(x, y, w, b, w1, b1, w2,
                                        mxu_dtype=jnp.bfloat16)
    jax.block_until_ready((pooled16, ylin16))
    assert jnp.allclose(pooled16, ref_pooled, atol=5e-2, rtol=5e-2), "pooled bf16 mismatch"
    assert jnp.allclose(ylin16, ref_ylin, atol=5e-2, rtol=5e-2), "ylin bf16 mismatch"

    print("KERNEL_OK")
</pallas_src>

<mosaic_0001>
module attributes {stable_mosaic.version = 11 : i64} {
  func.func @_attention_kernel(%arg0: i32, %arg1: memref<2x8x32xf32, #tpu.memory_space<vmem>>, %arg2: memref<2x32xf32, #tpu.memory_space<vmem>>, %arg3: memref<32x32xf32, #tpu.memory_space<vmem>>, %arg4: memref<1x32xf32, #tpu.memory_space<vmem>>, %arg5: memref<32x32xf32, #tpu.memory_space<vmem>>, %arg6: memref<1x32xf32, #tpu.memory_space<vmem>>, %arg7: memref<1x32xf32, #tpu.memory_space<vmem>>, %arg8: memref<2x32xf32, #tpu.memory_space<vmem>>, %arg9: memref<2x32xf32, #tpu.memory_space<vmem>>) attributes {dimension_semantics = [#tpu.dimension_semantics<parallel>], iteration_bounds = array<i64: 1>, scalar_prefetch = 0 : i64, scratch_operands = 0 : i64, tpu.core_type = #tpu.core_type<tc>, window_params = [{transform_indices = @transform_0, window_bounds = array<i64: 2, 8, 32>}, {transform_indices = @transform_1, window_bounds = array<i64: 2, 32>}, {pipeline_mode = #tpu.pipeline_mode<synchronous>, transform_indices = @transform_2, window_bounds = array<i64: 32, 32>}, {pipeline_mode = #tpu.pipeline_mode<synchronous>, transform_indices = @transform_3, window_bounds = array<i64: 1, 32>}, {pipeline_mode = #tpu.pipeline_mode<synchronous>, transform_indices = @transform_4, window_bounds = array<i64: 32, 32>}, {pipeline_mode = #tpu.pipeline_mode<synchronous>, transform_indices = @transform_5, window_bounds = array<i64: 1, 32>}, {pipeline_mode = #tpu.pipeline_mode<synchronous>, transform_indices = @transform_6, window_bounds = array<i64: 1, 32>}, {transform_indices = @transform_7, window_bounds = array<i64: 2, 32>}, {transform_indices = @transform_8, window_bounds = array<i64: 2, 32>}]} {
    %c0 = arith.constant 0 : index
    %c0_0 = arith.constant 0 : index
    %c0_1 = arith.constant 0 : index
    %0 = vector.load %arg1[%c0, %c0_0, %c0_1] : memref<2x8x32xf32, #tpu.memory_space<vmem>>, vector<2x8x32xf32>
    %c0_2 = arith.constant 0 : index
    %c0_3 = arith.constant 0 : index
    %1 = vector.load %arg2[%c0_2, %c0_3] : memref<2x32xf32, #tpu.memory_space<vmem>>, vector<2x32xf32>
    %c0_4 = arith.constant 0 : index
    %c0_5 = arith.constant 0 : index
    %2 = vector.load %arg5[%c0_4, %c0_5] : memref<32x32xf32, #tpu.memory_space<vmem>>, vector<32x32xf32>
    %cst = arith.constant dense<0.000000e+00> : vector<2x32xf32>
    %3 = tpu.matmul %1, %2, %cst {dimension_numbers = #tpu.dot_dimension_numbers<[1], [0], [0], [1], [0, 0, 1, 1], [], []>} : vector<2x32xf32>, vector<32x32xf32>, vector<2x32xf32> -> vector<2x32xf32>
    %c0_6 = arith.constant 0 : index
    %c0_7 = arith.constant 0 : index
    %4 = vector.load %arg6[%c0_6, %c0_7] : memref<1x32xf32, #tpu.memory_space<vmem>>, vector<1x32xf32>
    %5 = vector.broadcast %4 : vector<1x32xf32> to vector<2x32xf32>
    %6 = arith.addf %3, %5 : vector<2x32xf32>
    %7 = vector.shape_cast %0 : vector<2x8x32xf32> to vector<16x32xf32>
    %c0_8 = arith.constant 0 : index
    %c0_9 = arith.constant 0 : index
    %8 = vector.load %arg3[%c0_8, %c0_9] : memref<32x32xf32, #tpu.memory_space<vmem>>, vector<32x32xf32>
    %cst_10 = arith.constant dense<0.000000e+00> : vector<16x32xf32>
    %9 = tpu.matmul %7, %8, %cst_10 {dimension_numbers = #tpu.dot_dimension_numbers<[1], [0], [0], [1], [0, 0, 1, 1], [], []>} : vector<16x32xf32>, vector<32x32xf32>, vector<16x32xf32> -> vector<16x32xf32>
    %c0_11 = arith.constant 0 : index
    %c0_12 = arith.constant 0 : index
    %10 = vector.load %arg4[%c0_11, %c0_12] : memref<1x32xf32, #tpu.memory_space<vmem>>, vector<1x32xf32>
    %11 = vector.broadcast %10 : vector<1x32xf32> to vector<16x32xf32>
    %12 = arith.addf %9, %11 : vector<16x32xf32>
    %13 = vector.shape_cast %12 : vector<16x32xf32> to vector<2x8x32xf32>
    %14 = vector.shape_cast %6 : vector<2x32xf32> to vector<2x1x32xf32>
    %15 = vector.broadcast %14 : vector<2x1x32xf32> to vector<2x8x32xf32>
    %16 = arith.addf %13, %15 : vector<2x8x32xf32>
    %17 = math.tanh %16 : vector<2x8x32xf32>
    %c0_13 = arith.constant 0 : index
    %c0_14 = arith.constant 0 : index
    %18 = vector.load %arg7[%c0_13, %c0_14] : memref<1x32xf32, #tpu.memory_space<vmem>>, vector<1x32xf32>
    %19 = vector.shape_cast %18 : vector<1x32xf32> to vector<1x1x32xf32>
    %20 = vector.broadcast %19 : vector<1x1x32xf32> to vector<2x8x32xf32>
    %21 = arith.mulf %17, %20 : vector<2x8x32xf32>
    %cst_15 = arith.constant dense<0.000000e+00> : vector<2x8xf32>
    %22 = vector.multi_reduction <add>, %21, %cst_15 [2] : vector<2x8x32xf32> to vector<2x8xf32>
    %cst_16 = arith.constant dense<0xFF800000> : vector<2xf32>
    %23 = vector.multi_reduction <maximumf>, %22, %cst_16 [1] : vector<2x8xf32> to vector<2xf32>
    %24 = vector.shape_cast %23 : vector<2xf32> to vector<2x1xf32>
    %25 = vector.broadcast %24 : vector<2x1xf32> to vector<2x8xf32>
    %26 = arith.subf %22, %25 : vector<2x8xf32>
    %27 = math.exp %26 : vector<2x8xf32>
    %cst_17 = arith.constant dense<0.000000e+00> : vector<2xf32>
    %28 = vector.multi_reduction <add>, %27, %cst_17 [1] : vector<2x8xf32> to vector<2xf32>
    %29 = vector.shape_cast %28 : vector<2xf32> to vector<2x1xf32>
    %30 = vector.broadcast %29 : vector<2x1xf32> to vector<2x8xf32>
    %31 = arith.divf %27, %30 : vector<2x8xf32>
    %32 = vector.shape_cast %31 : vector<2x8xf32> to vector<2x8x1xf32>
    %33 = vector.broadcast %32 : vector<2x8x1xf32> to vector<2x8x32xf32>
    %34 = arith.mulf %33, %0 : vector<2x8x32xf32>
    %cst_18 = arith.constant dense<0.000000e+00> : vector<2x32xf32>
    %35 = vector.multi_reduction <add>, %34, %cst_18 [1] : vector<2x8x32xf32> to vector<2x32xf32>
    %c0_19 = arith.constant 0 : index
    %c0_20 = arith.constant 0 : index
    %36 = vector.load %arg8[%c0_19, %c0_20] : memref<2x32xf32, #tpu.memory_space<vmem>>, vector<2x32xf32>
    tpu.vector_store %arg8[%c0_19, %c0_20], %35 {strides = array<i32>} : memref<2x32xf32, #tpu.memory_space<vmem>>, vector<2x32xf32>,
    %c0_21 = arith.constant 0 : index
    %c0_22 = arith.constant 0 : index
    %37 = vector.load %arg9[%c0_21, %c0_22] : memref<2x32xf32, #tpu.memory_space<vmem>>, vector<2x32xf32>
    tpu.vector_store %arg9[%c0_21, %c0_22], %6 {strides = array<i32>} : memref<2x32xf32, #tpu.memory_space<vmem>>, vector<2x32xf32>,
    return
  }
  func.func @transform_0(%arg0: i32) -> (i32, i32, i32) {
    %c0_i32 = arith.constant 0 : i32
    %c0_i32_0 = arith.constant 0 : i32
    %c0_i32_1 = arith.constant 0 : i32
    return %arg0, %c0_i32, %c0_i32_0 : i32, i32, i32
  }
  func.func @transform_1(%arg0: i32) -> (i32, i32) {
    %c0_i32 = arith.constant 0 : i32
    %c0_i32_0 = arith.constant 0 : i32
    return %arg0, %c0_i32 : i32, i32
  }
  func.func @transform_2(%arg0: i32) -> (i32, i32) {
    %c0_i32 = arith.constant 0 : i32
    %c0_i32_0 = arith.constant 0 : i32
    %c0_i32_1 = arith.constant 0 : i32
    return %c0_i32, %c0_i32_0 : i32, i32
  }
  func.func @transform_3(%arg0: i32) -> (i32, i32) {
    %c0_i32 = arith.constant 0 : i32
    %c0_i32_0 = arith.constant 0 : i32
    %c0_i32_1 = arith.constant 0 : i32
    return %c0_i32, %c0_i32_0 : i32, i32
  }
  func.func @transform_4(%arg0: i32) -> (i32, i32) {
    %c0_i32 = arith.constant 0 : i32
    %c0_i32_0 = arith.constant 0 : i32
    %c0_i32_1 = arith.constant 0 : i32
    return %c0_i32, %c0_i32_0 : i32, i32
  }
  func.func @transform_5(%arg0: i32) -> (i32, i32) {
    %c0_i32 = arith.constant 0 : i32
    %c0_i32_0 = arith.constant 0 : i32
    %c0_i32_1 = arith.constant 0 : i32
    return %c0_i32, %c0_i32_0 : i32, i32
  }
  func.func @transform_6(%arg0: i32) -> (i32, i32) {
    %c0_i32 = arith.constant 0 : i32
    %c0_i32_0 = arith.constant 0 : i32
    %c0_i32_1 = arith.constant 0 : i32
    return %c0_i32, %c0_i32_0 : i32, i32
  }
  func.func @transform_7(%arg0: i32) -> (i32, i32) {
    %c0_i32 = arith.constant 0 : i32
    %c0_i32_0 = arith.constant 0 : i32
    return %arg0, %c0_i32 : i32, i32
  }
  func.func @transform_8(%arg0: i32) -> (i32, i32) {
    %c0_i32 = arith.constant 0 : i32
    %c0_i32_0 = arith.constant 0 : i32
    return %arg0, %c0_i32 : i32, i32
  }
}

</mosaic_0001>

<llo_original>
// kernel: tpu_custom_call.1
$region0: #{tpu_custom_call.1}
  #allocation0 [shape = 'u32[]', space=smem, size = 0x4, offset = 0x4, fixed_abs, tag = 'smem constant byte address 0x4 - core index']
  #allocation1 [shape = 'u32[144,128]{1,0:T(1,128)}', space=vmem, size = 0x12000, scoped, tag = 'internal scratch']
  %s0 = inlined_call_operand.hbm [shape: f32[2,8,32], index: 0, kind: input, shape index: {}]
  %s1 = inlined_call_operand.vmem [shape: f32[2,32], index: 1, kind: input, shape index: {}]
  %s2 = inlined_call_operand.hbm [shape: f32[32,32], index: 2, kind: input, shape index: {}]
  %s3 = inlined_call_operand.vmem [shape: f32[1,32], index: 3, kind: input, shape index: {}]
  %s4 = inlined_call_operand.hbm [shape: f32[32,32], index: 4, kind: input, shape index: {}]
  %s5 = inlined_call_operand.vmem [shape: f32[1,32], index: 5, kind: input, shape index: {}]
  %s6 = inlined_call_operand.vmem [shape: f32[1,32], index: 6, kind: input, shape index: {}]
  %s7 = inlined_call_operand.hbm [shape: f32[2,32], index: 7, kind: output, shape index: {0}]
  %s8 = inlined_call_operand.hbm [shape: f32[2,32], index: 8, kind: output, shape index: {1}]
  %9 = xla_tuple %s7, %s8
  %s10 = sld [smem:[#allocation0]]
  $region58: #{tpu_custom_call.1} parent=0
    _
  %s12 = ssub.s32 1, %s10
  %s13 = scalar_select 0, %s12, %s10
  $region1: #{tpu_custom_call.1} parent=0
    #allocation2 [shape = 'u8[8192]{0}', space=vmem, size = 0x2000, scoped, tag = 'input window, operand 0, single buffered']
    #allocation3 [shape = 's32[1]{0}', space=sflag, size = 0x4, scoped, tag = 'scoped memory for tpu_custom_call.1']
    #allocation4 [shape = 's32[1]{0}', space=sflag, size = 0x4, scoped, tag = 'scoped memory for tpu_custom_call.1']
    #allocation5 [shape = 'u8[16384]{0}', space=vmem, size = 0x4000, scoped, tag = 'input window, operand 2, single buffered']
    #allocation6 [shape = 's32[1]{0}', space=sflag, size = 0x4, scoped, tag = 'scoped memory for tpu_custom_call.1']
    #allocation7 [shape = 'u8[16384]{0}', space=vmem, size = 0x4000, scoped, tag = 'input window, operand 4, single buffered']
    #allocation8 [shape = 'u8[1024]{0}', space=vmem, size = 0x400, scoped, tag = 'output window, operand 0, single buffered']
    #allocation9 [shape = 'u8[1024]{0}', space=vmem, size = 0x400, scoped, tag = 'output window, operand 1, single buffered']
    #allocation10 [shape = 's32[1]{0}', space=sflag, size = 0x4, scoped, tag = 'scoped memory for tpu_custom_call.1']
    %14 = vsyncpa [#allocation3], 0
    %15 = vsyncpa [#allocation6], 0
    %16 = vsyncpa [#allocation4], 0
    %17 = vsyncpa [#allocation10], 0
    // Predicated region
    $region2: #{tpu_custom_call.1} parent=1 // pred_check
      _
    $region3: #{tpu_custom_call.1} parent=1 // pred_check_branch
      %19 = sbr.rel (0) target = $region5
    $region4: #{tpu_custom_call.1} parent=1 // pred_region
      %s21 = ssub.s32 256, 256
      %22 = vsyncadd [#allocation3], %s21
      %s23 = sshll.u32 [#allocation2], 4
      %s24 = int_to_ptr.vmem [resolvable:$true] %s23
      %29 = dma.hbm_to_vmem [thread:$0]  %s0, 256, %s24, [#allocation3], 128, 128, 8
    $region5: #{tpu_custom_call.1} parent=1 // pred_fallthru
      _
    // Predicated region
    $region6: #{tpu_custom_call.1} parent=1 // pred_check
      _
    $region7: #{tpu_custom_call.1} parent=1 // pred_check_branch
      %31 = sbr.rel (0) target = $region9
    $region8: #{tpu_custom_call.1} parent=1 // pred_region
      _
    $region9: #{tpu_custom_call.1} parent=1 // pred_fallthru
      _
    // Predicated region
    $region10: #{tpu_custom_call.1} parent=1 // pred_check
      _
    $region11: #{tpu_custom_call.1} parent=1 // pred_check_branch
      %33 = sbr.rel (0) target = $region13
    $region12: #{tpu_custom_call.1} parent=1 // pred_region
      %s35 = ssub.s32 512, 512
      %36 = vsyncadd [#allocation6], %s35
      %s37 = sshll.u32 [#allocation5], 4
      %s38 = int_to_ptr.vmem [resolvable:$true] %s37
      %43 = dma.hbm_to_vmem [thread:$0]  %s2, 512, %s38, [#allocation6], 128, 128, 8
    $region13: #{tpu_custom_call.1} parent=1 // pred_fallthru
      _
    // Predicated region
    $region14: #{tpu_custom_call.1} parent=1 // pred_check
      _
    $region15: #{tpu_custom_call.1} parent=1 // pred_check_branch
      %45 = sbr.rel (0) target = $region17
    $region16: #{tpu_custom_call.1} parent=1 // pred_region
      _
    $region17: #{tpu_custom_call.1} parent=1 // pred_fallthru
      _
    // Predicated region
    $region18: #{tpu_custom_call.1} parent=1 // pred_check
      _
    $region19: #{tpu_custom_call.1} parent=1 // pred_check_branch
      %47 = sbr.rel (0) target = $region21
    $region20: #{tpu_custom_call.1} parent=1 // pred_region
      %s49 = ssub.s32 512, 512
      %50 = vsyncadd [#allocation6], %s49
      %s51 = sshll.u32 [#allocation7], 4
      %s52 = int_to_ptr.vmem [resolvable:$true] %s51
      %57 = dma.hbm_to_vmem [thread:$0]  %s4, 512, %s52, [#allocation6], 128, 128, 8
    $region21: #{tpu_custom_call.1} parent=1 // pred_fallthru
      _
    // Predicated region
    $region22: #{tpu_custom_call.1} parent=1 // pred_check
      _
    $region23: #{tpu_custom_call.1} parent=1 // pred_check_branch
      %59 = sbr.rel (0) target = $region25
    $region24: #{tpu_custom_call.1} parent=1 // pred_region
      _
    $region25: #{tpu_custom_call.1} parent=1 // pred_fallthru
      _
    // Predicated region
    $region26: #{tpu_custom_call.1} parent=1 // pred_check
      _
    $region27: #{tpu_custom_call.1} parent=1 // pred_check_branch
      %61 = sbr.rel (0) target = $region29
    $region28: #{tpu_custom_call.1} parent=1 // pred_region
      _
    $region29: #{tpu_custom_call.1} parent=1 // pred_fallthru
      _
    // Predicated region
    $region30: #{tpu_custom_call.1} parent=1 // pred_check
      _
    $region31: #{tpu_custom_call.1} parent=1 // pred_check_branch
      %63 = sbr.rel (0) target = $region33
    $region32: #{tpu_custom_call.1} parent=1 // pred_region
      %64 = dma.done [#allocation3], 256
    $region33: #{tpu_custom_call.1} parent=1 // pred_fallthru
      _
    // Predicated region
    $region34: #{tpu_custom_call.1} parent=1 // pred_check
      _
    $region35: #{tpu_custom_call.1} parent=1 // pred_check_branch
      %66 = sbr.rel (0) target = $region37
    $region36: #{tpu_custom_call.1} parent=1 // pred_region
      %67 = dma.done [#allocation6], 512
    $region37: #{tpu_custom_call.1} parent=1 // pred_fallthru
      _
    // Predicated region
    $region38: #{tpu_custom_call.1} parent=1 // pred_check
      _
    $region39: #{tpu_custom_call.1} parent=1 // pred_check_branch
      %69 = sbr.rel (0) target = $region41
    $region40: #{tpu_custom_call.1} parent=1 // pred_region
      %70 = dma.done [#allocation6], 512
    $region41: #{tpu_custom_call.1} parent=1 // pred_fallthru
      _
    %v71 = vld [vmem:[#allocation2] sm:$0xff]
    %v72 = vld [vmem:[#allocation2 + $0x8] sm:$0xff]
    %v73 = vld [vmem:[%s1] sm:$0x3]
    %v74 = vld [vmem:[#allocation7] sm:$0xff]
    %v75 = vld [vmem:[#allocation7 + $0x8] sm:$0xff]
    %v76 = vld [vmem:[#allocation7 + $0x10] sm:$0xff]
    %v77 = vld [vmem:[#allocation7 + $0x18] sm:$0xff]
    %v78 = vld [vmem:[%s5] sm:$0x1]
    %v80 = vlaneseq
    %v81 = vshrl.u32 %v80, 7
    %v82 = vsub.s32 0, %v81
    %v83 = vrot.slane %v78, %v82
    %vm85 = vcmask 261120
    %v87 = vsel %vm85, %v73, 0
    %89 = vmatprep.subr.mxu0 0.0
    %90 = vmatpush1.msra.mxu0 %v74
    %91 = vmatprep.subr.mxu0 0.0
    %92 = vmatpush1.msra.mxu0 %v75
    %93 = vmatprep.subr.mxu0 0.0
    %94 = vmatpush1.msra.mxu0 %v76
    %95 = vmatprep.subr.mxu0 0.0
    %96 = vmatpush1.msra.mxu0 %v77
    %97 = vmatprep.subr.mxu0 0.0
    %98 = vmatpush1.msra.mxu0 0.0
    %99 = vmatprep.subr.mxu0 0.0
    %100 = vmatpush1.msra.mxu0 0.0
    %101 = vmatprep.subr.mxu0 0.0
    %102 = vmatpush1.msra.mxu0 0.0
    %103 = vmatprep.subr.mxu0 0.0
    %104 = vmatpush1.msra.mxu0 0.0
    %105 = vmatprep.subr.mxu0 0.0
    %106 = vmatpush1.msra.mxu0 0.0
    %107 = vmatprep.subr.mxu0 0.0
    %108 = vmatpush1.msra.mxu0 0.0
    %109 = vmatprep.subr.mxu0 0.0
    %110 = vmatpush1.msra.mxu0 0.0
    %111 = vmatprep.subr.mxu0 0.0
    %112 = vmatpush1.msra.mxu0 0.0
    %113 = vmatprep.subr.mxu0 0.0
    %114 = vmatpush1.msra.mxu0 0.0
    %115 = vmatprep.subr.mxu0 0.0
    %116 = vmatpush1.msra.mxu0 0.0
    %117 = vmatprep.subr.mxu0 0.0
    %118 = vmatpush1.msra.mxu0 0.0
    %119 = vmatprep.subr.mxu0 0.0
    %120 = vmatpush1.msra.mxu0 0.0
    %121 = vmatprep.subr.mxu0 0.0
    %122 = vmatpush1.msra.mxu0 0.0
    %123 = vmatprep.subr.mxu0 0.0
    %124 = vmatpush1.msra.mxu0 0.0
    %125 = vmatprep.subr.mxu0 0.0
    %126 = vmatpush1.msra.mxu0 0.0
    %127 = vmatprep.subr.mxu0 0.0
    %128 = vmatpush1.msra.mxu0 0.0
    %129 = vmatprep.subr.mxu0 0.0
    %130 = vmatpush1.msra.mxu0 0.0
    %131 = vmatprep.subr.mxu0 0.0
    %132 = vmatpush1.msra.mxu0 0.0
    %133 = vmatprep.subr.mxu0 0.0
    %134 = vmatpush1.msra.mxu0 0.0
    %135 = vmatprep.subr.mxu0 0.0
    %136 = vmatpush1.msra.mxu0 0.0
    %137 = vmatprep.subr.mxu0 0.0
    %138 = vmatpush1.msra.mxu0 0.0
    %139 = vmatprep.subr.mxu0 0.0
    %140 = vmatpush1.msra.mxu0 0.0
    %141 = vmatprep.subr.mxu0 0.0
    %142 = vmatpush1.msra.mxu0 0.0
    %143 = vmatprep.subr.mxu0 0.0
    %144 = vmatpush1.msra.mxu0 0.0
    %145 = vmatprep.subr.mxu0 0.0
    %146 = vmatpush1.msra.mxu0 0.0
    %147 = vmatprep.subr.mxu0 0.0
    %148 = vmatpush1.msra.mxu0 0.0
    %149 = vmatprep.subr.mxu0 0.0
    %150 = vmatpush1.msra.mxu0 0.0
    %151 = vmatprep.subr.mxu0 0.0
    %152 = vmatpush1.msra.mxu0 0.0
    %153 = vmatprep.mubr.f32.mxu0 0.0
    %154 = vmatmul.mubr.f32.gmra.mrb[0].mxu0 %v87
    %v155 = vpop.f32.mrb[0].mxu0
    %v156 = vadd.f32 %v83, %v155
    %v157 = vpop.f32.mrb[0].mxu0
    %158 = vdwg.mxu0
    %v159 = vld [vmem:[#allocation5] sm:$0xff]
    %v160 = vld [vmem:[#allocation5 + $0x8] sm:$0xff]
    %v161 = vld [vmem:[#allocation5 + $0x10] sm:$0xff]
    %v162 = vld [vmem:[#allocation5 + $0x18] sm:$0xff]
    %v163 = vld [vmem:[%s3] sm:$0x1]
    %v165 = vlaneseq
    %v166 = vshrl.u32 %v165, 7
    %v167 = vsub.s32 0, %v166
    %v168 = vrot.slane %v163, %v167
    %v171 = vsel %vm85, %v71, 0
    %v174 = vsel %vm85, %v72, 0
    %176 = vmatprep.subr.mxu0 0.0
    %177 = vmatpush1.msra.mxu0 %v159
    %178 = vmatprep.subr.mxu0 0.0
    %179 = vmatpush1.msra.mxu0 %v160
    %180 = vmatprep.subr.mxu0 0.0
    %181 = vmatpush1.msra.mxu0 %v161
    %182 = vmatprep.subr.mxu0 0.0
    %183 = vmatpush1.msra.mxu0 %v162
    %184 = vmatprep.subr.mxu0 0.0
    %185 = vmatpush1.msra.mxu0 0.0
    %186 = vmatprep.subr.mxu0 0.0
    %187 = vmatpush1.msra.mxu0 0.0
    %188 = vmatprep.subr.mxu0 0.0
    %189 = vmatpush1.msra.mxu0 0.0
    %190 = vmatprep.subr.mxu0 0.0
    %191 = vmatpush1.msra.mxu0 0.0
    %192 = vmatprep.subr.mxu0 0.0
    %193 = vmatpush1.msra.mxu0 0.0
    %194 = vmatprep.subr.mxu0 0.0
    %195 = vmatpush1.msra.mxu0 0.0
    %196 = vmatprep.subr.mxu0 0.0
    %197 = vmatpush1.msra.mxu0 0.0
    %198 = vmatprep.subr.mxu0 0.0
    %199 = vmatpush1.msra.mxu0 0.0
    %200 = vmatprep.subr.mxu0 0.0
    %201 = vmatpush1.msra.mxu0 0.0
    %202 = vmatprep.subr.mxu0 0.0
    %203 = vmatpush1.msra.mxu0 0.0
    %204 = vmatprep.subr.mxu0 0.0
    %205 = vmatpush1.msra.mxu0 0.0
    %206 = vmatprep.subr.mxu0 0.0
    %207 = vmatpush1.msra.mxu0 0.0
    %208 = vmatprep.subr.mxu0 0.0
    %209 = vmatpush1.msra.mxu0 0.0
    %210 = vmatprep.subr.mxu0 0.0
    %211 = vmatpush1.msra.mxu0 0.0
    %212 = vmatprep.subr.mxu0 0.0
    %213 = vmatpush1.msra.mxu0 0.0
    %214 = vmatprep.subr.mxu0 0.0
    %215 = vmatpush1.msra.mxu0 0.0
    %216 = vmatprep.subr.mxu0 0.0
    %217 = vmatpush1.msra.mxu0 0.0
    %218 = vmatprep.subr.mxu0 0.0
    %219 = vmatpush1.msra.mxu0 0.0
    %220 = vmatprep.subr.mxu0 0.0
    %221 = vmatpush1.msra.mxu0 0.0
    %222 = vmatprep.subr.mxu0 0.0
    %223 = vmatpush1.msra.mxu0 0.0
    %224 = vmatprep.subr.mxu0 0.0
    %225 = vmatpush1.msra.mxu0 0.0
    %226 = vmatprep.subr.mxu0 0.0
    %227 = vmatpush1.msra.mxu0 0.0
    %228 = vmatprep.subr.mxu0 0.0
    %229 = vmatpush1.msra.mxu0 0.0
    %230 = vmatprep.subr.mxu0 0.0
    %231 = vmatpush1.msra.mxu0 0.0
    %232 = vmatprep.subr.mxu0 0.0
    %233 = vmatpush1.msra.mxu0 0.0
    %234 = vmatprep.subr.mxu0 0.0
    %235 = vmatpush1.msra.mxu0 0.0
    %236 = vmatprep.subr.mxu0 0.0
    %237 = vmatpush1.msra.mxu0 0.0
    %238 = vmatprep.subr.mxu0 0.0
    %239 = vmatpush1.msra.mxu0 0.0
    %240 = vmatprep.mubr.f32.mxu0 0.0
    %241 = vmatmul.mubr.f32.gmra.mrb[0].mxu0 %v171
    %v242 = vpop.f32.mrb[0].mxu0
    %v243 = vadd.f32 %v168, %v242
    %v244 = vpop.f32.mrb[0].mxu0
    %245 = vmatprep.mubr.f32.mxu0 0.0
    %246 = vmatmul.mubr.f32.gmra.mrb[0].mxu0 %v174
    %v247 = vpop.f32.mrb[0].mxu0
    %v248 = vadd.f32 %v168, %v247
    %v249 = vpop.f32.mrb[0].mxu0
    %250 = vdwg.mxu0
    %v253 = vunpack.c.l.s4 1966171168
    %v254 = vunpack.c.0.s8 %v253
    %v255 = vlaneseq
    %v256 = vshrl.u32 %v255, 7
    %v257 = vsub.s32 %v254, %v256
    %v258 = vrot.slane %v156, %v257
    %v259 = vcombine.high %v258, %v258
    %v261 = vunpack.c.l.s4 1966171168
    %v262 = vunpack.c.0.s8 %v261
    %v263 = vlaneseq
    %v264 = vshrl.u32 %v263, 7
    %v265 = vsub.s32 %v262, %v264
    %v266 = vrot.slane %v258, %v265
    %v268 = vunpack.c.l.s4 1966171168
    %v269 = vunpack.c.0.s8 %v268
    %v270 = vlaneseq
    %v271 = vshrl.u32 %v270, 7
    %v272 = vsub.s32 %v269, %v271
    %v273 = vrot.slane %v259, %v272
    %v274 = vlaneseq
    %v275 = vshrl.u32 %v274, 7
    %v276 = vsub.s32 0, %v275
    %v277 = vrot.slane %v266, %v276
    %v278 = vlaneseq
    %v279 = vshrl.u32 %v278, 7
    %v280 = vsub.s32 0, %v279
    %v281 = vrot.slane %v273, %v280
    %v284 = vadd.f32 %v243, %v277
    %v285 = vadd.f32 %v248, %v281
    %v286 = vtanh.pop %v284
    %v287 = vtanh.pop %v285
    %v288 = vld [vmem:[%s6] sm:$0x1]
    %v290 = vlaneseq
    %v291 = vshrl.u32 %v290, 7
    %v292 = vsub.s32 0, %v291
    %v293 = vrot.slane %v288, %v292
    %v295 = vmul.f32 %v286, %v293
    %v296 = vmul.f32 %v287, %v293
    %v297 = vsel %vm85, %v295, 0.0
    %298 = vadd.xlane.f32.xlu0 %v297
    %v299 = vpop.xlane.xlu0 %298
    %v300 = vsel %vm85, %v296, 0.0
    %301 = vadd.xlane.f32.xlu0 %v300
    %v302 = vpop.xlane.xlu0 %301
    %v305 = vlaneseq
    %v306 = vand.u32 %v305, 127
    %v307 = vlaneseq
    %v308 = vshrl.u32 %v307, 7
    %v309 = vsub.s32 %v306, %v308
    %v310 = vrot.slane %v299, %v309
    %v311 = vlaneseq
    %v312 = vshrl.u32 %v311, 7
    %v313 = vsub.s32 %v306, %v312
    %v314 = vrot.slane %v302, %v313
    %vm315 = vcmask 1041409
    %v316 = vsel %vm315, %v314, %v310
    %vm318 = vcmask 58368
    %v319 = vsel %vm318, %v316, -inf
    %320 = vmax.xlane.f32.xlu0 %v319
    %v321 = vpop.xlane.xlu0 %320
    %v323 = vlaneseq
    %v324 = vshrl.u32 %v323, 7
    %v325 = vsub.s32 0, %v324
    %v326 = vrot.slane %v321, %v325
    %v327 = vlaneseq
    %v328 = vshrl.u32 %v327, 7
    %v329 = vsub.s32 1, %v328
    %v330 = vrot.slane %v321, %v329
    %v333 = vsub.f32 %v299, %v326
    %v334 = vsub.f32 %v302, %v330
    %v335 = vmul.f32 %v333, 1.442695
    %v336 = vpow.pop %v335
    %v337 = vmul.f32 %v334, 1.442695
    %v338 = vpow.pop %v337
    %341 = vset.pattern.permute.xlu0 0
    %342 = vperm.xlu0 %341, %v336
    %v343 = vpop.permute.xlu0 %342
    %344 = vset.pattern.permute.xlu0 0
    %345 = vperm.xlu0 %344, %v338
    %v346 = vpop.permute.xlu0 %345
    %v347 = vlaneseq
    %v348 = vshrl.u32 %v347, 7
    %v349 = vsub.s32 %v306, %v348
    %v350 = vrot.slane %v343, %v349
    %v351 = vlaneseq
    %v352 = vshrl.u32 %v351, 7
    %v353 = vsub.s32 %v306, %v352
    %v354 = vrot.slane %v346, %v353
    %v355 = vsel %vm315, %v354, %v350
    %v357 = vsel %vm318, %v355, 0.0
    %358 = vadd.xlane.f32.xlu0 %v357
    %v359 = vpop.xlane.xlu0 %358
    %v361 = vlaneseq
    %v362 = vshrl.u32 %v361, 7
    %v363 = vsub.s32 0, %v362
    %v364 = vrot.slane %v359, %v363
    %v365 = vlaneseq
    %v366 = vshrl.u32 %v365, 7
    %v367 = vsub.s32 1, %v366
    %v368 = vrot.slane %v359, %v367
    %v371 = vrcp.pop %v364
    %v372 = vmul.f32 %v336, %v371
    %v373 = vrcp.pop %v368
    %v374 = vmul.f32 %v338, %v373
    %376 = vset.pattern.permute.xlu0 0
    %377 = vperm.xlu0 %376, %v372
    %v378 = vpop.permute.xlu0 %377
    %381 = vset.pattern.permute.xlu0 0
    %382 = vperm.xlu0 %381, %v374
    %v383 = vpop.permute.xlu0 %382
    %v385 = vmul.f32 %v378, %v71
    %v386 = vmul.f32 %v383, %v72
    %v387 = vsel %vm85, %v385, 0.0
    %v388 = vrot.slane %v387, 4
    %v389 = vadd.f32 %v387, %v388
    %v390 = vrot.slane %v389, 2
    %v391 = vadd.f32 %v389, %v390
    %v392 = vrot.slane %v391, 1
    %v393 = vadd.f32 %v391, %v392
    %v394 = vsel %vm85, %v386, 0.0
    %v395 = vrot.slane %v394, 4
    %v396 = vadd.f32 %v394, %v395
    %v397 = vrot.slane %v396, 2
    %v398 = vadd.f32 %v396, %v397
    %v399 = vrot.slane %v398, 1
    %v400 = vadd.f32 %v398, %v399
    %v403 = vsel %vm315, %v400, %v393
    %vm405 = vcmask 254976
    %406 = vst.msk [vmem:[#allocation8] sm:$0x3] %vm405, %v403
    %407 = vst.msk [vmem:[#allocation9] sm:$0x3] %vm405, %v156
    // Predicated region
    $region42: #{tpu_custom_call.1} parent=1 // pred_check
      _
    $region43: #{tpu_custom_call.1} parent=1 // pred_check_branch
      %409 = sbr.rel (0) target = $region45
    $region44: #{tpu_custom_call.1} parent=1 // pred_region
      %s411 = ssub.s32 32, 32
      %412 = vsyncadd [#allocation4], %s411
      %s414 = sshll.u32 [#allocation8], 4
      %s415 = int_to_ptr.vmem [resolvable:$true] %s414
      %417 = dma.vmem_to_hbm [thread:$0]  %s415, 32, %s7, [#allocation4]
    $region45: #{tpu_custom_call.1} parent=1 // pred_fallthru
      _
    // Predicated region
    $region46: #{tpu_custom_call.1} parent=1 // pred_check
      _
    $region47: #{tpu_custom_call.1} parent=1 // pred_check_branch
      %419 = sbr.rel (0) target = $region49
    $region48: #{tpu_custom_call.1} parent=1 // pred_region
      %s421 = ssub.s32 32, 32
      %422 = vsyncadd [#allocation10], %s421
      %s424 = sshll.u32 [#allocation9], 4
      %s425 = int_to_ptr.vmem [resolvable:$true] %s424
      %427 = dma.vmem_to_hbm [thread:$0]  %s425, 32, %s8, [#allocation10]
    $region49: #{tpu_custom_call.1} parent=1 // pred_fallthru
      _
    // Predicated region
    $region50: #{tpu_custom_call.1} parent=1 // pred_check
      _
    $region51: #{tpu_custom_call.1} parent=1 // pred_check_branch
      %429 = sbr.rel (0) target = $region53
    $region52: #{tpu_custom_call.1} parent=1 // pred_region
      %430 = dma.done [#allocation4], 32
    $region53: #{tpu_custom_call.1} parent=1 // pred_fallthru
      _
    // Predicated region
    $region54: #{tpu_custom_call.1} parent=1 // pred_check
      _
    $region55: #{tpu_custom_call.1} parent=1 // pred_check_branch
      %432 = sbr.rel (0) target = $region57
    $region56: #{tpu_custom_call.1} parent=1 // pred_region
      %433 = dma.done [#allocation10], 32
    $region57: #{tpu_custom_call.1} parent=1 // pred_fallthru
      _
    %434 = vsyncpa [#allocation3], 1
    %435 = vsyncpa [#allocation6], 1
    %436 = vsyncpa [#allocation4], 1
    %437 = vsyncpa [#allocation10], 1

</llo_original>
